<compile_context>
chip_gen: v6e
topology: v6e:2x2x1
jax: 0.10.0
libtpu: 0.0.40
codegen_flags: <defaults>
</compile_context>

<pallas_src>
import functools

import jax
import jax.numpy as jnp
import numpy as np
from jax import lax
from jax.experimental import pallas as pl
from jax.experimental.pallas import tpu as pltpu

_ACTS = {
    "Tanh": jnp.tanh,
    "ReLU": lambda y: jnp.maximum(y, 0.0),
    "Sigmoid": jax.nn.sigmoid,
    "Identity": lambda y: y,
}


def _fixed_point_kernel(At_ref, b_ref, z_ref, *, gamma, tol2, max_iter,
                        act_str, unroll):
    """Solve x = act(gamma*A@x + b), write z = act(gamma*A@x* + b).

    Gridless path : At_ref [H, N, N] (At[h] = A[h].T), b_ref/z_ref [H, 1, N].
    Per-head path : At_ref [N, N] (head dim Squeezed away), b_ref/z_ref [1, N].
    At_ref may be bf16 (MXU fast path); x, b and accumulation stay f32.
    """
    act = _ACTS[act_str]
    batched = len(At_ref.shape) == 3

    def step(x):                                   # x: [.., 1, N] f32
        xw = x.astype(At_ref.dtype)                # bf16 MXU operand when enabled
        if batched:
            # out[h,0,m] = sum_n x[h,0,n] * At[h,n,m] = (A[h] @ x)[m]
            Ax = lax.dot_general(
                xw, At_ref[...],
                dimension_numbers=(((2,), (1,)), ((0,), (0,))),
                preferred_element_type=jnp.float32)
        else:
            Ax = jnp.dot(xw, At_ref[...], preferred_element_type=jnp.float32)
        return act(gamma * Ax + b_ref[...])

    # Reference iteration 0 collapses (x0 = 0 -> x_next = act(b)): no matmul.
    xb = act(b_ref[...])
    done0 = jnp.sum(xb * xb) < tol2                # break-before-assign: keep 0
    x0 = jnp.where(done0, jnp.zeros_like(xb), xb)

    def cond(carry):
        i, _, done = carry
        return jnp.logical_and(i < max_iter, jnp.logical_not(done))

    def body(carry):
        i, x, done = carry
        # Unrolled block: one scalar loop-back sync per `unroll` iterations;
        # per-step jnp.where blends keep break-before-assign bit-exact.
        for s in range(unroll):
            x_next = step(x)
            d = x - x_next
            conv = jnp.sum(d * d) < tol2           # squared Frobenius norm, no sqrt
            active = jnp.logical_and(jnp.logical_not(done), (i + s) < max_iter)
            x = jnp.where(jnp.logical_and(active, jnp.logical_not(conv)), x_next, x)
            done = jnp.logical_or(done, jnp.logical_and(active, conv))
        return i + unroll, x, done

    _, x, _ = lax.while_loop(cond, body, (jnp.int32(1), x0, done0))

    # final application outside the solve: z = act(gamma * A @ x* + b)
    z_ref[...] = step(x).astype(z_ref.dtype)


def _vmem_capacity_bytes():
    try:
        return int(pltpu.get_tpu_info().vmem_capacity_bytes)
    except Exception:
        pass
    try:
        kind = jax.devices()[0].device_kind.lower()
    except Exception:
        kind = ""
    # v7x: 64 MiB per TensorCore; v5e / v6e: 128 MiB.
    return (64 << 20) if "v7" in kind else (128 << 20)


def _is_v7x():
    try:
        return "v7" in jax.devices()[0].device_kind.lower()
    except Exception:
        return False


def fixed_point_layer(A, b, *, gamma=0.5, activation="Tanh", tol=1e-6,
                      max_iter=50, per_head=None, weight_dtype=None, unroll=2):
    """A: [H, N, N] f32, b: [H, N, 1] f32  ->  z: [H, N] f32.

    per_head=False : single kernel invocation, global convergence norm
                     (matches the reference semantics exactly).
    per_head=True  : grid over heads ("parallel" -> both TCs on v7x); only one
                     head's A resident at a time; PER-HEAD convergence norm.
    per_head=None  : auto (True on v7x with H >= 2, or when A does not fit).
    """
    H, N, N2 = A.shape
    assert N == N2 and b.shape == (H, N, 1)
    if max_iter < 1:
        raise ValueError("max_iter must be >= 1")
    A = jnp.asarray(A, jnp.float32)
    b = jnp.asarray(b, jnp.float32)

    # bf16 operator: ~2-3x faster MXU + half of A's VMEM, but perturbs the
    # fixed point by O(bf16 eps * ||A|| * ||x||) -> auto-enable only for loose tol.
    if weight_dtype is None:
        weight_dtype = jnp.bfloat16 if tol >= 1e-4 else jnp.float32
    weight_dtype = jnp.dtype(weight_dtype)

    At = jnp.swapaxes(A, 1, 2).astype(weight_dtype)   # one-time, XLA-side
    b2 = b.reshape(H, 1, N)                           # lane-dense RHS

    cap = _vmem_capacity_bytes()
    cap_eff = cap - (2 << 20)
    a_item = weight_dtype.itemsize
    a_bytes = H * N * N * a_item
    vec_bytes = H * N * 4

    fits_whole = a_bytes + 16 * vec_bytes + (4 << 20) <= cap_eff
    if per_head is None:
        # v7x: shard heads across both TensorCores; v5e/v6e: exact gridless
        # path (global norm, no per-grid-step overhead) whenever A fits.
        per_head = (_is_v7x() and H >= 2) or not fits_whole

    kernel = functools.partial(
        _fixed_point_kernel, gamma=float(gamma), tol2=float(tol) ** 2,
        max_iter=int(max_iter), act_str=activation, unroll=int(unroll))

    cost = pl.CostEstimate(
        flops=int(2 * H * N * N * (max_iter + 1)),
        transcendentals=(int(H * N * (max_iter + 1))
                         if activation in ("Tanh", "Sigmoid") else 0),
        bytes_accessed=int(a_bytes + 3 * vec_bytes))

    if not per_head:
        needed = a_bytes + 16 * vec_bytes
        if needed + (4 << 20) > cap_eff:
            raise ValueError(
                f"A ({a_bytes / 2**20:.1f} MiB) does not fit in VMEM "
                f"({cap / 2**20:.0f} MiB); use per_head=True or bf16 weights.")
        vmem_limit = int(min(cap_eff, max(needed + (8 << 20), 32 << 20)))
        z3 = pl.pallas_call(
            kernel,
            out_shape=jax.ShapeDtypeStruct((H, 1, N), jnp.float32),
            in_specs=[pl.BlockSpec(memory_space=pltpu.MemorySpace.VMEM),
                      pl.BlockSpec(memory_space=pltpu.MemorySpace.VMEM)],
            out_specs=pl.BlockSpec(memory_space=pltpu.MemorySpace.VMEM),
            compiler_params=pltpu.CompilerParams(vmem_limit_bytes=vmem_limit),
            cost_estimate=cost,
        )(At, b2)
    else:
        a_block = N * N * a_item
        small = 8 * N * 4 + (1 << 20)
        if a_block + small + (2 << 20) > cap_eff:
            # TODO(synk): N-tiled streaming or int8-quantized-A fallback.
            raise ValueError("one head's operator does not fit VMEM")
        double_buffered = 2 * a_block + small + (2 << 20) <= cap_eff
        if double_buffered:
            a_spec = pl.BlockSpec((pl.Squeezed(), N, N), lambda h: (h, 0, 0))
            vmem_need = 2 * a_block + small
        else:
            # Exposed next-head DMA is tiny vs a ~max_iter-iteration solve,
            # so a single buffer is nearly free when VMEM is tight (v7x).
            a_spec = pl.BlockSpec((pl.Squeezed(), N, N), lambda h: (h, 0, 0),
                                  pipeline_mode=pl.Buffered(1))
            vmem_need = a_block + small
        vmem_limit = int(min(cap_eff, max(vmem_need + (8 << 20), 32 << 20)))
        z3 = pl.pallas_call(
            kernel,
            out_shape=jax.ShapeDtypeStruct((H, 1, N), jnp.float32),
            grid_spec=pltpu.PrefetchScalarGridSpec(
                num_scalar_prefetch=0,
                grid=(H,),
                in_specs=[a_spec,
                          pl.BlockSpec((pl.Squeezed(), 1, N),
                                       lambda h: (h, 0, 0))],
                out_specs=pl.BlockSpec((pl.Squeezed(), 1, N),
                                       lambda h: (h, 0, 0))),
            compiler_params=pltpu.CompilerParams(
                dimension_semantics=("parallel",),
                vmem_limit_bytes=vmem_limit),
            cost_estimate=cost,
        )(At, b2)

    return z3.reshape(H, N)           # contiguous -> free, matches z.squeeze(-1)


def _reference(A, b, gamma, act_str, tol, max_iter):
    """Pure-JAX mirror of the PyTorch forward loop (including the early break)."""
    act = _ACTS[act_str]
    x = jnp.zeros_like(b)
    for _ in range(max_iter):
        x_next = act(gamma * jnp.einsum("hmn,hnk->hmk", A, x) + b)
        if float(jnp.linalg.norm(x - x_next)) < tol:
            break
        x = x_next
    z = act(gamma * jnp.einsum("hmn,hnk->hmk", A, x) + b)
    return z[..., 0]


if __name__ == "__main__":
    key = jax.random.PRNGKey(0)
    kA, kb = jax.random.split(key)

    H, N = 4, 16                      # heads (operators), nodes
    gamma, activation, tol, max_iter = 0.5, "Tanh", 1e-6, 50

    # Deterministic synthetic inputs; A scaled small so gamma*A is contractive.
    A = 0.1 * jax.random.normal(kA, (H, N, N), dtype=jnp.float32)
    b = jax.random.normal(kb, (H, N, 1), dtype=jnp.float32)

    # Default path (device-aware dispatch; f32 weights since tol is tight).
    z = fixed_point_layer(A, b, gamma=gamma, activation=activation,
                          tol=tol, max_iter=max_iter)
    z = jax.block_until_ready(z)

    z_ref = _reference(A, b, gamma, activation, tol, max_iter)
    assert z.shape == (H, N)
    assert np.allclose(np.asarray(z), np.asarray(z_ref), atol=1e-5), "mismatch vs reference"

    # Per-head grid path (v7x 2-TC friendly); per-head stopping criterion, so
    # results may differ from the global-norm path by O(sqrt(H) * tol).
    z_ph = fixed_point_layer(A, b, gamma=gamma, activation=activation,
                             tol=tol, max_iter=max_iter, per_head=True)
    z_ph = jax.block_until_ready(z_ph)
    assert np.allclose(np.asarray(z_ph), np.asarray(z), atol=1e-4), "per-head path mismatch"

    # bf16-weight MXU fast path: fixed point shifts by O(bf16 eps * ||A|| * ||x||).
    z_bf = fixed_point_layer(A, b, gamma=gamma, activation=activation,
                             tol=tol, max_iter=max_iter,
                             weight_dtype=jnp.bfloat16, per_head=False)
    z_bf = jax.block_until_ready(z_bf)
    assert np.allclose(np.asarray(z_bf), np.asarray(z), atol=1e-2), "bf16 path mismatch"

    print("KERNEL_OK")
</pallas_src>

<mosaic_0001>
module attributes {stable_mosaic.version = 11 : i64} {
  func.func @_fixed_point_kernel(%arg0: memref<4x16x16xf32, #tpu.memory_space<vmem>>, %arg1: memref<4x1x16xf32, #tpu.memory_space<vmem>>, %arg2: memref<4x1x16xf32, #tpu.memory_space<vmem>>) attributes {dimension_semantics = [], scalar_prefetch = 0 : i64, scratch_operands = 0 : i64, tpu.core_type = #tpu.core_type<tc>} {
    %c0 = arith.constant 0 : index
    %c0_0 = arith.constant 0 : index
    %c0_1 = arith.constant 0 : index
    %0 = vector.load %arg1[%c0, %c0_0, %c0_1] : memref<4x1x16xf32, #tpu.memory_space<vmem>>, vector<4x1x16xf32>
    %1 = math.tanh %0 : vector<4x1x16xf32>
    %2 = arith.mulf %1, %1 : vector<4x1x16xf32>
    %3 = vector.shape_cast %2 : vector<4x1x16xf32> to vector<1x4x1x16xf32>
    %cst = arith.constant dense<0.000000e+00> : vector<1xf32>
    %4 = vector.multi_reduction <add>, %3, %cst [1, 2, 3] : vector<1x4x1x16xf32> to vector<1xf32>
    %5 = vector.shape_cast %4 : vector<1xf32> to vector<1x1x1x1xf32>
    %6 = vector.extract %5[0, 0, 0, 0] : f32 from vector<1x1x1x1xf32>
    %cst_2 = arith.constant 9.99999996E-13 : f32
    %7 = arith.cmpf olt, %6, %cst_2 : f32
    %cst_3 = arith.constant 0.000000e+00 : f32
    %8 = vector.broadcast %cst_3 : f32 to vector<4x1x16xf32>
    %9 = arith.select %7, %8, %1 : vector<4x1x16xf32>
    %c1_i32 = arith.constant 1 : i32
    %10:3 = scf.while (%arg3 = %c1_i32, %arg4 = %9, %arg5 = %7) : (i32, vector<4x1x16xf32>, i1) -> (i32, vector<4x1x16xf32>, i1) {
      %c50_i32 = arith.constant 50 : i32
      %19 = arith.cmpi slt, %arg3, %c50_i32 : i32
      %true = arith.constant true
      %20 = arith.xori %arg5, %true : i1
      %21 = arith.andi %19, %20 : i1
      scf.condition(%21) %arg3, %arg4, %arg5 : i32, vector<4x1x16xf32>, i1
    } do {
    ^bb0(%arg3: i32, %arg4: vector<4x1x16xf32>, %arg5: i1):
      %c0_15 = arith.constant 0 : index
      %c0_16 = arith.constant 0 : index
      %c0_17 = arith.constant 0 : index
      %19 = vector.load %arg0[%c0_15, %c0_16, %c0_17] : memref<4x16x16xf32, #tpu.memory_space<vmem>>, vector<4x16x16xf32>
      %cst_18 = arith.constant dense<0.000000e+00> : vector<4x1x16xf32>
      %20 = tpu.matmul %arg4, %19, %cst_18 {dimension_numbers = #tpu.dot_dimension_numbers<[2], [1], [1], [2], [0, 0, 0, 1, 1, 2], [0], [0]>} : vector<4x1x16xf32>, vector<4x16x16xf32>, vector<4x1x16xf32> -> vector<4x1x16xf32>
      %cst_19 = arith.constant 5.000000e-01 : f32
      %21 = vector.broadcast %cst_19 : f32 to vector<4x1x16xf32>
      %22 = arith.mulf %21, %20 : vector<4x1x16xf32>
      %c0_20 = arith.constant 0 : index
      %c0_21 = arith.constant 0 : index
      %c0_22 = arith.constant 0 : index
      %23 = vector.load %arg1[%c0_20, %c0_21, %c0_22] : memref<4x1x16xf32, #tpu.memory_space<vmem>>, vector<4x1x16xf32>
      %24 = arith.addf %22, %23 : vector<4x1x16xf32>
      %25 = math.tanh %24 : vector<4x1x16xf32>
      %26 = arith.subf %arg4, %25 : vector<4x1x16xf32>
      %27 = arith.mulf %26, %26 : vector<4x1x16xf32>
      %28 = vector.shape_cast %27 : vector<4x1x16xf32> to vector<1x4x1x16xf32>
      %cst_23 = arith.constant dense<0.000000e+00> : vector<1xf32>
      %29 = vector.multi_reduction <add>, %28, %cst_23 [1, 2, 3] : vector<1x4x1x16xf32> to vector<1xf32>
      %30 = vector.shape_cast %29 : vector<1xf32> to vector<1x1x1x1xf32>
      %31 = vector.extract %30[0, 0, 0, 0] : f32 from vector<1x1x1x1xf32>
      %cst_24 = arith.constant 9.99999996E-13 : f32
      %32 = arith.cmpf olt, %31, %cst_24 : f32
      %true = arith.constant true
      %33 = arith.xori %arg5, %true : i1
      %c0_i32 = arith.constant 0 : i32
      %34 = arith.addi %arg3, %c0_i32 : i32
      %c50_i32 = arith.constant 50 : i32
      %35 = arith.cmpi slt, %34, %c50_i32 : i32
      %36 = arith.andi %33, %35 : i1
      %true_25 = arith.constant true
      %37 = arith.xori %32, %true_25 : i1
      %38 = arith.andi %36, %37 : i1
      %39 = arith.select %38, %25, %arg4 : vector<4x1x16xf32>
      %40 = arith.andi %36, %32 : i1
      %41 = arith.ori %arg5, %40 : i1
      %c0_26 = arith.constant 0 : index
      %c0_27 = arith.constant 0 : index
      %c0_28 = arith.constant 0 : index
      %42 = vector.load %arg0[%c0_26, %c0_27, %c0_28] : memref<4x16x16xf32, #tpu.memory_space<vmem>>, vector<4x16x16xf32>
      %cst_29 = arith.constant dense<0.000000e+00> : vector<4x1x16xf32>
      %43 = tpu.matmul %39, %42, %cst_29 {dimension_numbers = #tpu.dot_dimension_numbers<[2], [1], [1], [2], [0, 0, 0, 1, 1, 2], [0], [0]>} : vector<4x1x16xf32>, vector<4x16x16xf32>, vector<4x1x16xf32> -> vector<4x1x16xf32>
      %cst_30 = arith.constant 5.000000e-01 : f32
      %44 = vector.broadcast %cst_30 : f32 to vector<4x1x16xf32>
      %45 = arith.mulf %44, %43 : vector<4x1x16xf32>
      %c0_31 = arith.constant 0 : index
      %c0_32 = arith.constant 0 : index
      %c0_33 = arith.constant 0 : index
      %46 = vector.load %arg1[%c0_31, %c0_32, %c0_33] : memref<4x1x16xf32, #tpu.memory_space<vmem>>, vector<4x1x16xf32>
      %47 = arith.addf %45, %46 : vector<4x1x16xf32>
      %48 = math.tanh %47 : vector<4x1x16xf32>
      %49 = arith.subf %39, %48 : vector<4x1x16xf32>
      %50 = arith.mulf %49, %49 : vector<4x1x16xf32>
      %51 = vector.shape_cast %50 : vector<4x1x16xf32> to vector<1x4x1x16xf32>
      %cst_34 = arith.constant dense<0.000000e+00> : vector<1xf32>
      %52 = vector.multi_reduction <add>, %51, %cst_34 [1, 2, 3] : vector<1x4x1x16xf32> to vector<1xf32>
      %53 = vector.shape_cast %52 : vector<1xf32> to vector<1x1x1x1xf32>
      %54 = vector.extract %53[0, 0, 0, 0] : f32 from vector<1x1x1x1xf32>
      %cst_35 = arith.constant 9.99999996E-13 : f32
      %55 = arith.cmpf olt, %54, %cst_35 : f32
      %true_36 = arith.constant true
      %56 = arith.xori %41, %true_36 : i1
      %c1_i32_37 = arith.constant 1 : i32
      %57 = arith.addi %arg3, %c1_i32_37 : i32
      %c50_i32_38 = arith.constant 50 : i32
      %58 = arith.cmpi slt, %57, %c50_i32_38 : i32
      %59 = arith.andi %56, %58 : i1
      %true_39 = arith.constant true
      %60 = arith.xori %55, %true_39 : i1
      %61 = arith.andi %59, %60 : i1
      %62 = arith.select %61, %48, %39 : vector<4x1x16xf32>
      %63 = arith.andi %59, %55 : i1
      %64 = arith.ori %41, %63 : i1
      %c2_i32 = arith.constant 2 : i32
      %65 = arith.addi %arg3, %c2_i32 : i32
      scf.yield %65, %62, %64 : i32, vector<4x1x16xf32>, i1
    }
    %c0_4 = arith.constant 0 : index
    %c0_5 = arith.constant 0 : index
    %c0_6 = arith.constant 0 : index
    %11 = vector.load %arg0[%c0_4, %c0_5, %c0_6] : memref<4x16x16xf32, #tpu.memory_space<vmem>>, vector<4x16x16xf32>
    %cst_7 = arith.constant dense<0.000000e+00> : vector<4x1x16xf32>
    %12 = tpu.matmul %10#1, %11, %cst_7 {dimension_numbers = #tpu.dot_dimension_numbers<[2], [1], [1], [2], [0, 0, 0, 1, 1, 2], [0], [0]>} : vector<4x1x16xf32>, vector<4x16x16xf32>, vector<4x1x16xf32> -> vector<4x1x16xf32>
    %cst_8 = arith.constant 5.000000e-01 : f32
    %13 = vector.broadcast %cst_8 : f32 to vector<4x1x16xf32>
    %14 = arith.mulf %13, %12 : vector<4x1x16xf32>
    %c0_9 = arith.constant 0 : index
    %c0_10 = arith.constant 0 : index
    %c0_11 = arith.constant 0 : index
    %15 = vector.load %arg1[%c0_9, %c0_10, %c0_11] : memref<4x1x16xf32, #tpu.memory_space<vmem>>, vector<4x1x16xf32>
    %16 = arith.addf %14, %15 : vector<4x1x16xf32>
    %17 = math.tanh %16 : vector<4x1x16xf32>
    %c0_12 = arith.constant 0 : index
    %c0_13 = arith.constant 0 : index
    %c0_14 = arith.constant 0 : index
    %18 = vector.load %arg2[%c0_12, %c0_13, %c0_14] : memref<4x1x16xf32, #tpu.memory_space<vmem>>, vector<4x1x16xf32>
    tpu.vector_store %arg2[%c0_12, %c0_13, %c0_14], %17 {strides = array<i32>} : memref<4x1x16xf32, #tpu.memory_space<vmem>>, vector<4x1x16xf32>,
    return
  }
}

</mosaic_0001>

<llo_original>
// kernel: tpu_custom_call.1
$region0: #{tpu_custom_call.1}
  #allocation0 [shape = 'u32[]', space=smem, size = 0x4, offset = 0x4, fixed_abs, tag = 'smem constant byte address 0x4 - core index']
  #allocation1 [shape = 'u32[144,128]{1,0:T(1,128)}', space=vmem, size = 0x12000, scoped, tag = 'internal scratch']
  %s0 = inlined_call_operand.hbm [shape: f32[4,16,16], index: 0, kind: input, shape index: {}]
  %s1 = inlined_call_operand.hbm [shape: f32[4,1,16], index: 1, kind: input, shape index: {}]
  %s2 = inlined_call_operand.hbm [shape: f32[4,1,16], index: 2, kind: output, shape index: {}]
  %s3 = sld [smem:[#allocation0]]
  $region33: #{tpu_custom_call.1} parent=0
    _
  %s5 = ssub.s32 1, %s3
  %s6 = scalar_select 0, %s5, %s3
  $region1: #{tpu_custom_call.1} parent=0
    #allocation2 [shape = 'u8[32768]{0}', space=vmem, size = 0x8000, scoped, tag = 'input window, operand 0, single buffered']
    #allocation3 [shape = 's32[1]{0}', space=sflag, size = 0x4, scoped, tag = 'scoped memory for tpu_custom_call.1']
    #allocation4 [shape = 's32[1]{0}', space=sflag, size = 0x4, scoped, tag = 'scoped memory for tpu_custom_call.1']
    #allocation5 [shape = 'u8[2048]{0}', space=vmem, size = 0x800, scoped, tag = 'input window, operand 1, single buffered']
    #allocation6 [shape = 's32[1]{0}', space=sflag, size = 0x4, scoped, tag = 'scoped memory for tpu_custom_call.1']
    #allocation7 [shape = 'u8[2048]{0}', space=vmem, size = 0x800, scoped, tag = 'output window, operand 0, single buffered']
    %7 = vsyncpa [#allocation3], 0
    %8 = vsyncpa [#allocation6], 0
    %9 = vsyncpa [#allocation4], 0
    // Predicated region
    $region2: #{tpu_custom_call.1} parent=1 // pred_check
      _
    $region3: #{tpu_custom_call.1} parent=1 // pred_check_branch
      %11 = sbr.rel (0) target = $region5
    $region4: #{tpu_custom_call.1} parent=1 // pred_region
      %s13 = ssub.s32 1024, 1024
      %14 = vsyncadd [#allocation3], %s13
      %s15 = sshll.u32 [#allocation2], 4
      %s16 = int_to_ptr.vmem [resolvable:$true] %s15
      %21 = dma.hbm_to_vmem [thread:$0]  %s0, 1024, %s16, [#allocation3], 128, 128, 8
    $region5: #{tpu_custom_call.1} parent=1 // pred_fallthru
      _
    // Predicated region
    $region6: #{tpu_custom_call.1} parent=1 // pred_check
      _
    $region7: #{tpu_custom_call.1} parent=1 // pred_check_branch
      %23 = sbr.rel (0) target = $region9
    $region8: #{tpu_custom_call.1} parent=1 // pred_region
      %s25 = ssub.s32 64, 64
      %26 = vsyncadd [#allocation6], %s25
      %s27 = sshll.u32 [#allocation5], 4
      %s28 = int_to_ptr.vmem [resolvable:$true] %s27
      %33 = dma.hbm_to_vmem [thread:$0]  %s1, 64, %s28, [#allocation6], 16, 16, 1
    $region9: #{tpu_custom_call.1} parent=1 // pred_fallthru
      _
    // Predicated region
    $region10: #{tpu_custom_call.1} parent=1 // pred_check
      _
    $region11: #{tpu_custom_call.1} parent=1 // pred_check_branch
      %35 = sbr.rel (0) target = $region13
    $region12: #{tpu_custom_call.1} parent=1 // pred_region
      %36 = dma.done [#allocation3], 1024
    $region13: #{tpu_custom_call.1} parent=1 // pred_fallthru
      _
    // Predicated region
    $region14: #{tpu_custom_call.1} parent=1 // pred_check
      _
    $region15: #{tpu_custom_call.1} parent=1 // pred_check_branch
      %38 = sbr.rel (0) target = $region17
    $region16: #{tpu_custom_call.1} parent=1 // pred_region
      %39 = dma.done [#allocation6], 64
    $region17: #{tpu_custom_call.1} parent=1 // pred_fallthru
      _
    %v40 = vld [vmem:[#allocation5] sm:$0x1]
    %v41 = vld [vmem:[#allocation5 + $0x1] sm:$0x1]
    %v42 = vld [vmem:[#allocation5 + $0x2] sm:$0x1]
    %v43 = vld [vmem:[#allocation5 + $0x3] sm:$0x1]
    %v44 = vtanh.pop %v40
    %v45 = vtanh.pop %v41
    %v46 = vtanh.pop %v42
    %v47 = vtanh.pop %v43
    %v48 = vmul.f32 %v44, %v44
    %v49 = vmul.f32 %v45, %v45
    %v50 = vmul.f32 %v46, %v46
    %v51 = vmul.f32 %v47, %v47
    %vm52 = vcmask 122880
    %v53 = vsel %vm52, %v48, 0.0
    %v54 = vsel %vm52, %v49, 0.0
    %v55 = vadd.f32 %v53, %v54
    %v56 = vsel %vm52, %v50, 0.0
    %v57 = vadd.f32 %v55, %v56
    %v58 = vsel %vm52, %v51, 0.0
    %v59 = vadd.f32 %v57, %v58
    %60 = vadd.xlane.f32.xlu0 %v59
    %v61 = vpop.xlane.xlu0 %60
    %v62 = vrot.slane %v61, 4
    %v63 = vadd.f32 %v61, %v62
    %v64 = vrot.slane %v63, 2
    %v65 = vadd.f32 %v63, %v64
    %v66 = vrot.slane %v65, 1
    %v67 = vadd.f32 %v65, %v66
    %s68 = vtos %v67
    %p69 = scmp.lt.f32.partialorder %s68, 1e-12
    %s70 = scalar_select %p69, 1, 0
    %v71 = vstv %s70
    %vm72 = vcmp.eq.s32.totalorder %v71, 1
    %v73 = vsel %vm72, 0.0, %v44
    %v74 = vsel %vm72, 0.0, %v45
    %v75 = vsel %vm72, 0.0, %v46
    %v76 = vsel %vm72, 0.0, %v47
    // While loop
    $region18: #{tpu_custom_call.1} parent=1 // loop_pre_header
      _
    $region19: #{tpu_custom_call.1} parent=1 // loop_header
      %s78 = sphi 1, %s796
      %v79 = vphi %v73, %v789
      %v80 = vphi %v74, %v790
      %v81 = vphi %v75, %v791
      %v82 = vphi %v76, %v792
      %p83 = pphi %p69, %p795
      %p84 = scmp.lt.s32.totalorder %s78, 50
      %p85 = pneg %p83
      %p86 = pnand %p84, %p85
      %p87 = pneg %p86
    $region20: #{tpu_custom_call.1} parent=1 // loop_header_branch
      %89 = sbr.rel (%p86) target = $region24
    $region21: #{tpu_custom_call.1} parent=1 // loop_body
      %v90 = vld [vmem:[#allocation2] sm:$0xff]
      %v91 = vld [vmem:[#allocation2 + $0x8] sm:$0xff]
      %v92 = vld [vmem:[#allocation2 + $0x10] sm:$0xff]
      %v93 = vld [vmem:[#allocation2 + $0x18] sm:$0xff]
      %v94 = vld [vmem:[#allocation2 + $0x20] sm:$0xff]
      %v95 = vld [vmem:[#allocation2 + $0x28] sm:$0xff]
      %v96 = vld [vmem:[#allocation2 + $0x30] sm:$0xff]
      %v97 = vld [vmem:[#allocation2 + $0x38] sm:$0xff]
      %vm98 = vcmask 130048
      %v100 = vsel %vm98, %v79, 0
      %102 = vmatprep.subr.mxu0 0.0
      %103 = vmatpush1.msra.mxu0 0.0
      %104 = vmatprep.subr.mxu0 0.0
      %105 = vmatpush1.msra.mxu0 0.0
      %106 = vmatprep.subr.mxu0 0.0
      %107 = vmatpush1.msra.mxu0 0.0
      %108 = vmatprep.subr.mxu0 0.0
      %109 = vmatpush1.msra.mxu0 0.0
      %110 = vmatprep.subr.mxu0 0.0
      %111 = vmatpush1.msra.mxu0 0.0
      %112 = vmatprep.subr.mxu0 0.0
      %113 = vmatpush1.msra.mxu0 0.0
      %114 = vmatprep.subr.mxu0 0.0
      %115 = vmatpush1.msra.mxu0 0.0
      %116 = vmatprep.subr.mxu0 0.0
      %117 = vmatpush1.msra.mxu0 0.0
      %118 = vmatprep.subr.mxu0 0.0
      %119 = vmatpush1.msra.mxu0 0.0
      %120 = vmatprep.subr.mxu0 0.0
      %121 = vmatpush1.msra.mxu0 0.0
      %122 = vmatprep.subr.mxu0 0.0
      %123 = vmatpush1.msra.mxu0 0.0
      %124 = vmatprep.subr.mxu0 0.0
      %125 = vmatpush1.msra.mxu0 0.0
      %126 = vmatprep.subr.mxu0 0.0
      %127 = vmatpush1.msra.mxu0 0.0
      %128 = vmatprep.subr.mxu0 0.0
      %129 = vmatpush1.msra.mxu0 0.0
      %130 = vmatprep.subr.mxu0 0.0
      %131 = vmatpush1.msra.mxu0 %v91
      %132 = vmatprep.subr.mxu0 0.0
      %133 = vmatpush1.msra.mxu0 %v90
      %134 = vmatprep.subr.mxu0 0.0
      %135 = vmatpush2.msra.mxu0 0.0
      %136 = vmatprep.subr.mxu0 0.0
      %137 = vmatpush2.msra.mxu0 0.0
      %138 = vmatprep.subr.mxu0 0.0
      %139 = vmatpush2.msra.mxu0 0.0
      %140 = vmatprep.subr.mxu0 0.0
      %141 = vmatpush2.msra.mxu0 0.0
      %142 = vmatprep.subr.mxu0 0.0
      %143 = vmatpush2.msra.mxu0 0.0
      %144 = vmatprep.subr.mxu0 0.0
      %145 = vmatpush2.msra.mxu0 0.0
      %146 = vmatprep.subr.mxu0 0.0
      %147 = vmatpush2.msra.mxu0 0.0
      %148 = vmatprep.subr.mxu0 0.0
      %149 = vmatpush2.msra.mxu0 0.0
      %150 = vmatprep.subr.mxu0 0.0
      %151 = vmatpush2.msra.mxu0 0.0
      %152 = vmatprep.subr.mxu0 0.0
      %153 = vmatpush2.msra.mxu0 0.0
      %154 = vmatprep.subr.mxu0 0.0
      %155 = vmatpush2.msra.mxu0 0.0
      %156 = vmatprep.subr.mxu0 0.0
      %157 = vmatpush2.msra.mxu0 0.0
      %158 = vmatprep.subr.mxu0 0.0
      %159 = vmatpush2.msra.mxu0 0.0
      %160 = vmatprep.subr.mxu0 0.0
      %161 = vmatpush2.msra.mxu0 0.0
      %162 = vmatprep.subr.mxu0 0.0
      %163 = vmatpush2.msra.mxu0 0.0
      %164 = vmatprep.subr.mxu0 0.0
      %165 = vmatpush2.msra.mxu0 0.0
      %166 = vmatprep.mubr.f32.mxu0 0.0
      %167 = vmatmul.mubr.f32.gmra.mxu0 %v100
      %v168 = vpop.f32.mrf.mxu0
      %v169 = vadd.f32 0.0, %v168
      %v170 = vpop.f32.mrf.mxu0
      %171 = vdwg.mxu0
      %v173 = vsel %vm98, %v80, 0
      %175 = vmatprep.subr.mxu0 0.0
      %176 = vmatpush1.msra.mxu0 0.0
      %177 = vmatprep.subr.mxu0 0.0
      %178 = vmatpush1.msra.mxu0 0.0
      %179 = vmatprep.subr.mxu0 0.0
      %180 = vmatpush1.msra.mxu0 0.0
      %181 = vmatprep.subr.mxu0 0.0
      %182 = vmatpush1.msra.mxu0 0.0
      %183 = vmatprep.subr.mxu0 0.0
      %184 = vmatpush1.msra.mxu0 0.0
      %185 = vmatprep.subr.mxu0 0.0
      %186 = vmatpush1.msra.mxu0 0.0
      %187 = vmatprep.subr.mxu0 0.0
      %188 = vmatpush1.msra.mxu0 0.0
      %189 = vmatprep.subr.mxu0 0.0
      %190 = vmatpush1.msra.mxu0 0.0
      %191 = vmatprep.subr.mxu0 0.0
      %192 = vmatpush1.msra.mxu0 0.0
      %193 = vmatprep.subr.mxu0 0.0
      %194 = vmatpush1.msra.mxu0 0.0
      %195 = vmatprep.subr.mxu0 0.0
      %196 = vmatpush1.msra.mxu0 0.0
      %197 = vmatprep.subr.mxu0 0.0
      %198 = vmatpush1.msra.mxu0 0.0
      %199 = vmatprep.subr.mxu0 0.0
      %200 = vmatpush1.msra.mxu0 0.0
      %201 = vmatprep.subr.mxu0 0.0
      %202 = vmatpush1.msra.mxu0 0.0
      %203 = vmatprep.subr.mxu0 0.0
      %204 = vmatpush1.msra.mxu0 %v93
      %205 = vmatprep.subr.mxu0 0.0
      %206 = vmatpush1.msra.mxu0 %v92
      %207 = vmatprep.subr.mxu0 0.0
      %208 = vmatpush2.msra.mxu0 0.0
      %209 = vmatprep.subr.mxu0 0.0
      %210 = vmatpush2.msra.mxu0 0.0
      %211 = vmatprep.subr.mxu0 0.0
      %212 = vmatpush2.msra.mxu0 0.0
      %213 = vmatprep.subr.mxu0 0.0
      %214 = vmatpush2.msra.mxu0 0.0
      %215 = vmatprep.subr.mxu0 0.0
      %216 = vmatpush2.msra.mxu0 0.0
      %217 = vmatprep.subr.mxu0 0.0
      %218 = vmatpush2.msra.mxu0 0.0
      %219 = vmatprep.subr.mxu0 0.0
      %220 = vmatpush2.msra.mxu0 0.0
      %221 = vmatprep.subr.mxu0 0.0
      %222 = vmatpush2.msra.mxu0 0.0
      %223 = vmatprep.subr.mxu0 0.0
      %224 = vmatpush2.msra.mxu0 0.0
      %225 = vmatprep.subr.mxu0 0.0
      %226 = vmatpush2.msra.mxu0 0.0
      %227 = vmatprep.subr.mxu0 0.0
      %228 = vmatpush2.msra.mxu0 0.0
      %229 = vmatprep.subr.mxu0 0.0
      %230 = vmatpush2.msra.mxu0 0.0
      %231 = vmatprep.subr.mxu0 0.0
      %232 = vmatpush2.msra.mxu0 0.0
      %233 = vmatprep.subr.mxu0 0.0
      %234 = vmatpush2.msra.mxu0 0.0
      %235 = vmatprep.subr.mxu0 0.0
      %236 = vmatpush2.msra.mxu0 0.0
      %237 = vmatprep.subr.mxu0 0.0
      %238 = vmatpush2.msra.mxu0 0.0
      %239 = vmatprep.mubr.f32.mxu0 0.0
      %240 = vmatmul.mubr.f32.gmra.mxu0 %v173
      %v241 = vpop.f32.mrf.mxu0
      %v242 = vadd.f32 0.0, %v241
      %v243 = vpop.f32.mrf.mxu0
      %244 = vdwg.mxu0
      %v246 = vsel %vm98, %v81, 0
      %248 = vmatprep.subr.mxu0 0.0
      %249 = vmatpush1.msra.mxu0 0.0
      %250 = vmatprep.subr.mxu0 0.0
      %251 = vmatpush1.msra.mxu0 0.0
      %252 = vmatprep.subr.mxu0 0.0
      %253 = vmatpush1.msra.mxu0 0.0
      %254 = vmatprep.subr.mxu0 0.0
      %255 = vmatpush1.msra.mxu0 0.0
      %256 = vmatprep.subr.mxu0 0.0
      %257 = vmatpush1.msra.mxu0 0.0
      %258 = vmatprep.subr.mxu0 0.0
      %259 = vmatpush1.msra.mxu0 0.0
      %260 = vmatprep.subr.mxu0 0.0
      %261 = vmatpush1.msra.mxu0 0.0
      %262 = vmatprep.subr.mxu0 0.0
      %263 = vmatpush1.msra.mxu0 0.0
      %264 = vmatprep.subr.mxu0 0.0
      %265 = vmatpush1.msra.mxu0 0.0
      %266 = vmatprep.subr.mxu0 0.0
      %267 = vmatpush1.msra.mxu0 0.0
      %268 = vmatprep.subr.mxu0 0.0
      %269 = vmatpush1.msra.mxu0 0.0
      %270 = vmatprep.subr.mxu0 0.0
      %271 = vmatpush1.msra.mxu0 0.0
      %272 = vmatprep.subr.mxu0 0.0
      %273 = vmatpush1.msra.mxu0 0.0
      %274 = vmatprep.subr.mxu0 0.0
      %275 = vmatpush1.msra.mxu0 0.0
      %276 = vmatprep.subr.mxu0 0.0
      %277 = vmatpush1.msra.mxu0 %v95
      %278 = vmatprep.subr.mxu0 0.0
      %279 = vmatpush1.msra.mxu0 %v94
      %280 = vmatprep.subr.mxu0 0.0
      %281 = vmatpush2.msra.mxu0 0.0
      %282 = vmatprep.subr.mxu0 0.0
      %283 = vmatpush2.msra.mxu0 0.0
      %284 = vmatprep.subr.mxu0 0.0
      %285 = vmatpush2.msra.mxu0 0.0
      %286 = vmatprep.subr.mxu0 0.0
      %287 = vmatpush2.msra.mxu0 0.0
      %288 = vmatprep.subr.mxu0 0.0
      %289 = vmatpush2.msra.mxu0 0.0
      %290 = vmatprep.subr.mxu0 0.0
      %291 = vmatpush2.msra.mxu0 0.0
      %292 = vmatprep.subr.mxu0 0.0
      %293 = vmatpush2.msra.mxu0 0.0
      %294 = vmatprep.subr.mxu0 0.0
      %295 = vmatpush2.msra.mxu0 0.0
      %296 = vmatprep.subr.mxu0 0.0
      %297 = vmatpush2.msra.mxu0 0.0
      %298 = vmatprep.subr.mxu0 0.0
      %299 = vmatpush2.msra.mxu0 0.0
      %300 = vmatprep.subr.mxu0 0.0
      %301 = vmatpush2.msra.mxu0 0.0
      %302 = vmatprep.subr.mxu0 0.0
      %303 = vmatpush2.msra.mxu0 0.0
      %304 = vmatprep.subr.mxu0 0.0
      %305 = vmatpush2.msra.mxu0 0.0
      %306 = vmatprep.subr.mxu0 0.0
      %307 = vmatpush2.msra.mxu0 0.0
      %308 = vmatprep.subr.mxu0 0.0
      %309 = vmatpush2.msra.mxu0 0.0
      %310 = vmatprep.subr.mxu0 0.0
      %311 = vmatpush2.msra.mxu0 0.0
      %312 = vmatprep.mubr.f32.mxu0 0.0
      %313 = vmatmul.mubr.f32.gmra.mxu0 %v246
      %v314 = vpop.f32.mrf.mxu0
      %v315 = vadd.f32 0.0, %v314
      %v316 = vpop.f32.mrf.mxu0
      %317 = vdwg.mxu0
      %v319 = vsel %vm98, %v82, 0
      %321 = vmatprep.subr.mxu0 0.0
      %322 = vmatpush1.msra.mxu0 0.0
      %323 = vmatprep.subr.mxu0 0.0
      %324 = vmatpush1.msra.mxu0 0.0
      %325 = vmatprep.subr.mxu0 0.0
      %326 = vmatpush1.msra.mxu0 0.0
      %327 = vmatprep.subr.mxu0 0.0
      %328 = vmatpush1.msra.mxu0 0.0
      %329 = vmatprep.subr.mxu0 0.0
      %330 = vmatpush1.msra.mxu0 0.0
      %331 = vmatprep.subr.mxu0 0.0
      %332 = vmatpush1.msra.mxu0 0.0
      %333 = vmatprep.subr.mxu0 0.0
      %334 = vmatpush1.msra.mxu0 0.0
      %335 = vmatprep.subr.mxu0 0.0
      %336 = vmatpush1.msra.mxu0 0.0
      %337 = vmatprep.subr.mxu0 0.0
      %338 = vmatpush1.msra.mxu0 0.0
      %339 = vmatprep.subr.mxu0 0.0
      %340 = vmatpush1.msra.mxu0 0.0
      %341 = vmatprep.subr.mxu0 0.0
      %342 = vmatpush1.msra.mxu0 0.0
      %343 = vmatprep.subr.mxu0 0.0
      %344 = vmatpush1.msra.mxu0 0.0
      %345 = vmatprep.subr.mxu0 0.0
      %346 = vmatpush1.msra.mxu0 0.0
      %347 = vmatprep.subr.mxu0 0.0
      %348 = vmatpush1.msra.mxu0 0.0
      %349 = vmatprep.subr.mxu0 0.0
      %350 = vmatpush1.msra.mxu0 %v97
      %351 = vmatprep.subr.mxu0 0.0
      %352 = vmatpush1.msra.mxu0 %v96
      %353 = vmatprep.subr.mxu0 0.0
      %354 = vmatpush2.msra.mxu0 0.0
      %355 = vmatprep.subr.mxu0 0.0
      %356 = vmatpush2.msra.mxu0 0.0
      %357 = vmatprep.subr.mxu0 0.0
      %358 = vmatpush2.msra.mxu0 0.0
      %359 = vmatprep.subr.mxu0 0.0
      %360 = vmatpush2.msra.mxu0 0.0
      %361 = vmatprep.subr.mxu0 0.0
      %362 = vmatpush2.msra.mxu0 0.0
      %363 = vmatprep.subr.mxu0 0.0
      %364 = vmatpush2.msra.mxu0 0.0
      %365 = vmatprep.subr.mxu0 0.0
      %366 = vmatpush2.msra.mxu0 0.0
      %367 = vmatprep.subr.mxu0 0.0
      %368 = vmatpush2.msra.mxu0 0.0
      %369 = vmatprep.subr.mxu0 0.0
      %370 = vmatpush2.msra.mxu0 0.0
      %371 = vmatprep.subr.mxu0 0.0
      %372 = vmatpush2.msra.mxu0 0.0
      %373 = vmatprep.subr.mxu0 0.0
      %374 = vmatpush2.msra.mxu0 0.0
      %375 = vmatprep.subr.mxu0 0.0
      %376 = vmatpush2.msra.mxu0 0.0
      %377 = vmatprep.subr.mxu0 0.0
      %378 = vmatpush2.msra.mxu0 0.0
      %379 = vmatprep.subr.mxu0 0.0
      %380 = vmatpush2.msra.mxu0 0.0
      %381 = vmatprep.subr.mxu0 0.0
      %382 = vmatpush2.msra.mxu0 0.0
      %383 = vmatprep.subr.mxu0 0.0
      %384 = vmatpush2.msra.mxu0 0.0
      %385 = vmatprep.mubr.f32.mxu0 0.0
      %386 = vmatmul.mubr.f32.gmra.mxu0 %v319
      %v387 = vpop.f32.mrf.mxu0
      %v388 = vadd.f32 0.0, %v387
      %v389 = vpop.f32.mrf.mxu0
      %390 = vdwg.mxu0
      %v391 = vmul.f32 %v169, 0.5
      %v392 = vmul.f32 %v242, 0.5
      %v393 = vmul.f32 %v315, 0.5
      %v394 = vmul.f32 %v388, 0.5
      %v395 = vld [vmem:[#allocation5] sm:$0x1]
      %v396 = vld [vmem:[#allocation5 + $0x1] sm:$0x1]
      %v397 = vld [vmem:[#allocation5 + $0x2] sm:$0x1]
      %v398 = vld [vmem:[#allocation5 + $0x3] sm:$0x1]
      %v399 = vadd.f32 %v391, %v395
      %v400 = vadd.f32 %v392, %v396
      %v401 = vadd.f32 %v393, %v397
      %v402 = vadd.f32 %v394, %v398
      %v403 = vtanh.pop %v399
      %v404 = vtanh.pop %v400
      %v405 = vtanh.pop %v401
      %v406 = vtanh.pop %v402
      %v407 = vsub.f32 %v79, %v403
      %v408 = vsub.f32 %v80, %v404
      %v409 = vsub.f32 %v81, %v405
      %v410 = vsub.f32 %v82, %v406
      %v411 = vmul.f32 %v407, %v407
      %v412 = vmul.f32 %v408, %v408
      %v413 = vmul.f32 %v409, %v409
      %v414 = vmul.f32 %v410, %v410
      %v415 = vsel %vm52, %v411, 0.0
      %v416 = vsel %vm52, %v412, 0.0
      %v417 = vadd.f32 %v415, %v416
      %v418 = vsel %vm52, %v413, 0.0
      %v419 = vadd.f32 %v417, %v418
      %v420 = vsel %vm52, %v414, 0.0
      %v421 = vadd.f32 %v419, %v420
      %422 = vadd.xlane.f32.xlu0 %v421
      %v423 = vpop.xlane.xlu0 %422
      %v424 = vrot.slane %v423, 4
      %v425 = vadd.f32 %v423, %v424
      %v426 = vrot.slane %v425, 2
      %v427 = vadd.f32 %v425, %v426
      %v428 = vrot.slane %v427, 1
      %v429 = vadd.f32 %v427, %v428
      %s430 = vtos %v429
      %p431 = scmp.lt.f32.partialorder %s430, 1e-12
      %p432 = pneg %p83
      %p433 = scmp.lt.s32.totalorder %s78, 50
      %p434 = pnand %p432, %p433
      %p435 = pneg %p434
      %p436 = pneg %p431
      %p437 = pnand %p435, %p436
      %p438 = pneg %p437
      %s439 = scalar_select %p438, 1, 0
      %v440 = vstv %s439
      %vm441 = vcmp.eq.s32.totalorder %v440, 1
      %v442 = vsel %vm441, %v403, %v79
      %v443 = vsel %vm441, %v404, %v80
      %v444 = vsel %vm441, %v405, %v81
      %v445 = vsel %vm441, %v406, %v82
      %p446 = pnand %p435, %p431
      %p447 = pneg %p446
      %p448 = por %p83, %p447
      %v450 = vsel %vm98, %v442, 0
      %452 = vmatprep.subr.mxu0 0.0
      %453 = vmatpush1.msra.mxu0 0.0
      %454 = vmatprep.subr.mxu0 0.0
      %455 = vmatpush1.msra.mxu0 0.0
      %456 = vmatprep.subr.mxu0 0.0
      %457 = vmatpush1.msra.mxu0 0.0
      %458 = vmatprep.subr.mxu0 0.0
      %459 = vmatpush1.msra.mxu0 0.0
      %460 = vmatprep.subr.mxu0 0.0
      %461 = vmatpush1.msra.mxu0 0.0
      %462 = vmatprep.subr.mxu0 0.0
      %463 = vmatpush1.msra.mxu0 0.0
      %464 = vmatprep.subr.mxu0 0.0
      %465 = vmatpush1.msra.mxu0 0.0
      %466 = vmatprep.subr.mxu0 0.0
      %467 = vmatpush1.msra.mxu0 0.0
      %468 = vmatprep.subr.mxu0 0.0
      %469 = vmatpush1.msra.mxu0 0.0
      %470 = vmatprep.subr.mxu0 0.0
      %471 = vmatpush1.msra.mxu0 0.0
      %472 = vmatprep.subr.mxu0 0.0
      %473 = vmatpush1.msra.mxu0 0.0
      %474 = vmatprep.subr.mxu0 0.0
      %475 = vmatpush1.msra.mxu0 0.0
      %476 = vmatprep.subr.mxu0 0.0
      %477 = vmatpush1.msra.mxu0 0.0
      %478 = vmatprep.subr.mxu0 0.0
      %479 = vmatpush1.msra.mxu0 0.0
      %480 = vmatprep.subr.mxu0 0.0
      %481 = vmatpush1.msra.mxu0 %v91
      %482 = vmatprep.subr.mxu0 0.0
      %483 = vmatpush1.msra.mxu0 %v90
      %484 = vmatprep.subr.mxu0 0.0
      %485 = vmatpush2.msra.mxu0 0.0
      %486 = vmatprep.subr.mxu0 0.0
      %487 = vmatpush2.msra.mxu0 0.0
      %488 = vmatprep.subr.mxu0 0.0
      %489 = vmatpush2.msra.mxu0 0.0
      %490 = vmatprep.subr.mxu0 0.0
      %491 = vmatpush2.msra.mxu0 0.0
      %492 = vmatprep.subr.mxu0 0.0
      %493 = vmatpush2.msra.mxu0 0.0
      %494 = vmatprep.subr.mxu0 0.0
      %495 = vmatpush2.msra.mxu0 0.0
      %496 = vmatprep.subr.mxu0 0.0
      %497 = vmatpush2.msra.mxu0 0.0
      %498 = vmatprep.subr.mxu0 0.0
      %499 = vmatpush2.msra.mxu0 0.0
      %500 = vmatprep.subr.mxu0 0.0
      %501 = vmatpush2.msra.mxu0 0.0
      %502 = vmatprep.subr.mxu0 0.0
      %503 = vmatpush2.msra.mxu0 0.0
      %504 = vmatprep.subr.mxu0 0.0
      %505 = vmatpush2.msra.mxu0 0.0
      %506 = vmatprep.subr.mxu0 0.0
      %507 = vmatpush2.msra.mxu0 0.0
      %508 = vmatprep.subr.mxu0 0.0
      %509 = vmatpush2.msra.mxu0 0.0
      %510 = vmatprep.subr.mxu0 0.0
      %511 = vmatpush2.msra.mxu0 0.0
      %512 = vmatprep.subr.mxu0 0.0
      %513 = vmatpush2.msra.mxu0 0.0
      %514 = vmatprep.subr.mxu0 0.0
      %515 = vmatpush2.msra.mxu0 0.0
      %516 = vmatprep.mubr.f32.mxu0 0.0
      %517 = vmatmul.mubr.f32.gmra.mxu0 %v450
      %v518 = vpop.f32.mrf.mxu0
      %v519 = vadd.f32 0.0, %v518
      %v520 = vpop.f32.mrf.mxu0
      %521 = vdwg.mxu0
      %v523 = vsel %vm98, %v443, 0
      %525 = vmatprep.subr.mxu0 0.0
      %526 = vmatpush1.msra.mxu0 0.0
      %527 = vmatprep.subr.mxu0 0.0
      %528 = vmatpush1.msra.mxu0 0.0
      %529 = vmatprep.subr.mxu0 0.0
      %530 = vmatpush1.msra.mxu0 0.0
      %531 = vmatprep.subr.mxu0 0.0
      %532 = vmatpush1.msra.mxu0 0.0
      %533 = vmatprep.subr.mxu0 0.0
      %534 = vmatpush1.msra.mxu0 0.0
      %535 = vmatprep.subr.mxu0 0.0
      %536 = vmatpush1.msra.mxu0 0.0
      %537 = vmatprep.subr.mxu0 0.0
      %538 = vmatpush1.msra.mxu0 0.0
      %539 = vmatprep.subr.mxu0 0.0
      %540 = vmatpush1.msra.mxu0 0.0
      %541 = vmatprep.subr.mxu0 0.0
      %542 = vmatpush1.msra.mxu0 0.0
      %543 = vmatprep.subr.mxu0 0.0
      %544 = vmatpush1.msra.mxu0 0.0
      %545 = vmatprep.subr.mxu0 0.0
      %546 = vmatpush1.msra.mxu0 0.0
      %547 = vmatprep.subr.mxu0 0.0
      %548 = vmatpush1.msra.mxu0 0.0
      %549 = vmatprep.subr.mxu0 0.0
      %550 = vmatpush1.msra.mxu0 0.0
      %551 = vmatprep.subr.mxu0 0.0
      %552 = vmatpush1.msra.mxu0 0.0
      %553 = vmatprep.subr.mxu0 0.0
      %554 = vmatpush1.msra.mxu0 %v93
      %555 = vmatprep.subr.mxu0 0.0
      %556 = vmatpush1.msra.mxu0 %v92
      %557 = vmatprep.subr.mxu0 0.0
      %558 = vmatpush2.msra.mxu0 0.0
      %559 = vmatprep.subr.mxu0 0.0
      %560 = vmatpush2.msra.mxu0 0.0
      %561 = vmatprep.subr.mxu0 0.0
      %562 = vmatpush2.msra.mxu0 0.0
      %563 = vmatprep.subr.mxu0 0.0
      %564 = vmatpush2.msra.mxu0 0.0
      %565 = vmatprep.subr.mxu0 0.0
      %566 = vmatpush2.msra.mxu0 0.0
      %567 = vmatprep.subr.mxu0 0.0
      %568 = vmatpush2.msra.mxu0 0.0
      %569 = vmatprep.subr.mxu0 0.0
      %570 = vmatpush2.msra.mxu0 0.0
      %571 = vmatprep.subr.mxu0 0.0
      %572 = vmatpush2.msra.mxu0 0.0
      %573 = vmatprep.subr.mxu0 0.0
      %574 = vmatpush2.msra.mxu0 0.0
      %575 = vmatprep.subr.mxu0 0.0
      %576 = vmatpush2.msra.mxu0 0.0
      %577 = vmatprep.subr.mxu0 0.0
      %578 = vmatpush2.msra.mxu0 0.0
      %579 = vmatprep.subr.mxu0 0.0
      %580 = vmatpush2.msra.mxu0 0.0
      %581 = vmatprep.subr.mxu0 0.0
      %582 = vmatpush2.msra.mxu0 0.0
      %583 = vmatprep.subr.mxu0 0.0
      %584 = vmatpush2.msra.mxu0 0.0
      %585 = vmatprep.subr.mxu0 0.0
      %586 = vmatpush2.msra.mxu0 0.0
      %587 = vmatprep.subr.mxu0 0.0
      %588 = vmatpush2.msra.mxu0 0.0
      %589 = vmatprep.mubr.f32.mxu0 0.0
      %590 = vmatmul.mubr.f32.gmra.mxu0 %v523
      %v591 = vpop.f32.mrf.mxu0
      %v592 = vadd.f32 0.0, %v591
      %v593 = vpop.f32.mrf.mxu0
      %594 = vdwg.mxu0
      %v596 = vsel %vm98, %v444, 0
      %598 = vmatprep.subr.mxu0 0.0
      %599 = vmatpush1.msra.mxu0 0.0
      %600 = vmatprep.subr.mxu0 0.0
      %601 = vmatpush1.msra.mxu0 0.0
      %602 = vmatprep.subr.mxu0 0.0
      %603 = vmatpush1.msra.mxu0 0.0
      %604 = vmatprep.subr.mxu0 0.0
      %605 = vmatpush1.msra.mxu0 0.0
      %606 = vmatprep.subr.mxu0 0.0
      %607 = vmatpush1.msra.mxu0 0.0
      %608 = vmatprep.subr.mxu0 0.0
      %609 = vmatpush1.msra.mxu0 0.0
      %610 = vmatprep.subr.mxu0 0.0
      %611 = vmatpush1.msra.mxu0 0.0
      %612 = vmatprep.subr.mxu0 0.0
      %613 = vmatpush1.msra.mxu0 0.0
      %614 = vmatprep.subr.mxu0 0.0
      %615 = vmatpush1.msra.mxu0 0.0
      %616 = vmatprep.subr.mxu0 0.0
      %617 = vmatpush1.msra.mxu0 0.0
      %618 = vmatprep.subr.mxu0 0.0
      %619 = vmatpush1.msra.mxu0 0.0
      %620 = vmatprep.subr.mxu0 0.0
      %621 = vmatpush1.msra.mxu0 0.0
      %622 = vmatprep.subr.mxu0 0.0
      %623 = vmatpush1.msra.mxu0 0.0
      %624 = vmatprep.subr.mxu0 0.0
      %625 = vmatpush1.msra.mxu0 0.0
      %626 = vmatprep.subr.mxu0 0.0
      %627 = vmatpush1.msra.mxu0 %v95
      %628 = vmatprep.subr.mxu0 0.0
      %629 = vmatpush1.msra.mxu0 %v94
      %630 = vmatprep.subr.mxu0 0.0
      %631 = vmatpush2.msra.mxu0 0.0
      %632 = vmatprep.subr.mxu0 0.0
      %633 = vmatpush2.msra.mxu0 0.0
      %634 = vmatprep.subr.mxu0 0.0
      %635 = vmatpush2.msra.mxu0 0.0
      %636 = vmatprep.subr.mxu0 0.0
      %637 = vmatpush2.msra.mxu0 0.0
      %638 = vmatprep.subr.mxu0 0.0
      %639 = vmatpush2.msra.mxu0 0.0
      %640 = vmatprep.subr.mxu0 0.0
      %641 = vmatpush2.msra.mxu0 0.0
      %642 = vmatprep.subr.mxu0 0.0
      %643 = vmatpush2.msra.mxu0 0.0
      %644 = vmatprep.subr.mxu0 0.0
      %645 = vmatpush2.msra.mxu0 0.0
      %646 = vmatprep.subr.mxu0 0.0
      %647 = vmatpush2.msra.mxu0 0.0
      %648 = vmatprep.subr.mxu0 0.0
      %649 = vmatpush2.msra.mxu0 0.0
      %650 = vmatprep.subr.mxu0 0.0
      %651 = vmatpush2.msra.mxu0 0.0
      %652 = vmatprep.subr.mxu0 0.0
      %653 = vmatpush2.msra.mxu0 0.0
      %654 = vmatprep.subr.mxu0 0.0
      %655 = vmatpush2.msra.mxu0 0.0
      %656 = vmatprep.subr.mxu0 0.0
      %657 = vmatpush2.msra.mxu0 0.0
      %658 = vmatprep.subr.mxu0 0.0
      %659 = vmatpush2.msra.mxu0 0.0
      %660 = vmatprep.subr.mxu0 0.0
      %661 = vmatpush2.msra.mxu0 0.0
      %662 = vmatprep.mubr.f32.mxu0 0.0
      %663 = vmatmul.mubr.f32.gmra.mxu0 %v596
      %v664 = vpop.f32.mrf.mxu0
      %v665 = vadd.f32 0.0, %v664
      %v666 = vpop.f32.mrf.mxu0
      %667 = vdwg.mxu0
      %v669 = vsel %vm98, %v445, 0
      %671 = vmatprep.subr.mxu0 0.0
      %672 = vmatpush1.msra.mxu0 0.0
      %673 = vmatprep.subr.mxu0 0.0
      %674 = vmatpush1.msra.mxu0 0.0
      %675 = vmatprep.subr.mxu0 0.0
      %676 = vmatpush1.msra.mxu0 0.0
      %677 = vmatprep.subr.mxu0 0.0
      %678 = vmatpush1.msra.mxu0 0.0
      %679 = vmatprep.subr.mxu0 0.0
      %680 = vmatpush1.msra.mxu0 0.0
      %681 = vmatprep.subr.mxu0 0.0
      %682 = vmatpush1.msra.mxu0 0.0
      %683 = vmatprep.subr.mxu0 0.0
      %684 = vmatpush1.msra.mxu0 0.0
      %685 = vmatprep.subr.mxu0 0.0
      %686 = vmatpush1.msra.mxu0 0.0
      %687 = vmatprep.subr.mxu0 0.0
      %688 = vmatpush1.msra.mxu0 0.0
      %689 = vmatprep.subr.mxu0 0.0
      %690 = vmatpush1.msra.mxu0 0.0
      %691 = vmatprep.subr.mxu0 0.0
      %692 = vmatpush1.msra.mxu0 0.0
      %693 = vmatprep.subr.mxu0 0.0
      %694 = vmatpush1.msra.mxu0 0.0
      %695 = vmatprep.subr.mxu0 0.0
      %696 = vmatpush1.msra.mxu0 0.0
      %697 = vmatprep.subr.mxu0 0.0
      %698 = vmatpush1.msra.mxu0 0.0
      %699 = vmatprep.subr.mxu0 0.0
      %700 = vmatpush1.msra.mxu0 %v97
      %701 = vmatprep.subr.mxu0 0.0
      %702 = vmatpush1.msra.mxu0 %v96
      %703 = vmatprep.subr.mxu0 0.0
      %704 = vmatpush2.msra.mxu0 0.0
      %705 = vmatprep.subr.mxu0 0.0
      %706 = vmatpush2.msra.mxu0 0.0
      %707 = vmatprep.subr.mxu0 0.0
      %708 = vmatpush2.msra.mxu0 0.0
      %709 = vmatprep.subr.mxu0 0.0
      %710 = vmatpush2.msra.mxu0 0.0
      %711 = vmatprep.subr.mxu0 0.0
      %712 = vmatpush2.msra.mxu0 0.0
      %713 = vmatprep.subr.mxu0 0.0
      %714 = vmatpush2.msra.mxu0 0.0
      %715 = vmatprep.subr.mxu0 0.0
      %716 = vmatpush2.msra.mxu0 0.0
      %717 = vmatprep.subr.mxu0 0.0
      %718 = vmatpush2.msra.mxu0 0.0
      %719 = vmatprep.subr.mxu0 0.0
      %720 = vmatpush2.msra.mxu0 0.0
      %721 = vmatprep.subr.mxu0 0.0
      %722 = vmatpush2.msra.mxu0 0.0
      %723 = vmatprep.subr.mxu0 0.0
      %724 = vmatpush2.msra.mxu0 0.0
      %725 = vmatprep.subr.mxu0 0.0
      %726 = vmatpush2.msra.mxu0 0.0
      %727 = vmatprep.subr.mxu0 0.0
      %728 = vmatpush2.msra.mxu0 0.0
      %729 = vmatprep.subr.mxu0 0.0
      %730 = vmatpush2.msra.mxu0 0.0
      %731 = vmatprep.subr.mxu0 0.0
      %732 = vmatpush2.msra.mxu0 0.0
      %733 = vmatprep.subr.mxu0 0.0
      %734 = vmatpush2.msra.mxu0 0.0
      %735 = vmatprep.mubr.f32.mxu0 0.0
      %736 = vmatmul.mubr.f32.gmra.mxu0 %v669
      %v737 = vpop.f32.mrf.mxu0
      %v738 = vadd.f32 0.0, %v737
      %v739 = vpop.f32.mrf.mxu0
      %740 = vdwg.mxu0
      %v741 = vmul.f32 %v519, 0.5
      %v742 = vmul.f32 %v592, 0.5
      %v743 = vmul.f32 %v665, 0.5
      %v744 = vmul.f32 %v738, 0.5
      %v745 = vadd.f32 %v741, %v395
      %v746 = vadd.f32 %v742, %v396
      %v747 = vadd.f32 %v743, %v397
      %v748 = vadd.f32 %v744, %v398
      %v749 = vtanh.pop %v745
      %v750 = vtanh.pop %v746
      %v751 = vtanh.pop %v747
      %v752 = vtanh.pop %v748
      %v753 = vsub.f32 %v442, %v749
      %v754 = vsub.f32 %v443, %v750
      %v755 = vsub.f32 %v444, %v751
      %v756 = vsub.f32 %v445, %v752
      %v757 = vmul.f32 %v753, %v753
      %v758 = vmul.f32 %v754, %v754
      %v759 = vmul.f32 %v755, %v755
      %v760 = vmul.f32 %v756, %v756
      %v761 = vsel %vm52, %v757, 0.0
      %v762 = vsel %vm52, %v758, 0.0
      %v763 = vadd.f32 %v761, %v762
      %v764 = vsel %vm52, %v759, 0.0
      %v765 = vadd.f32 %v763, %v764
      %v766 = vsel %vm52, %v760, 0.0
      %v767 = vadd.f32 %v765, %v766
      %768 = vadd.xlane.f32.xlu0 %v767
      %v769 = vpop.xlane.xlu0 %768
      %v770 = vrot.slane %v769, 4
      %v771 = vadd.f32 %v769, %v770
      %v772 = vrot.slane %v771, 2
      %v773 = vadd.f32 %v771, %v772
      %v774 = vrot.slane %v773, 1
      %v775 = vadd.f32 %v773, %v774
      %s776 = vtos %v775
      %p777 = scmp.lt.f32.partialorder %s776, 1e-12
      %p778 = pneg %p448
      %s779 = sadd.s32 %s78, 1
      %p780 = scmp.lt.s32.totalorder %s779, 50
      %p781 = pnand %p778, %p780
      %p782 = pneg %p781
      %p783 = pneg %p777
      %p784 = pnand %p782, %p783
      %p785 = pneg %p784
      %s786 = scalar_select %p785, 1, 0
      %v787 = vstv %s786
      %vm788 = vcmp.eq.s32.totalorder %v787, 1
      %v789 = vsel %vm788, %v749, %v442
      %v790 = vsel %vm788, %v750, %v443
      %v791 = vsel %vm788, %v751, %v444
      %v792 = vsel %vm788, %v752, %v445
      %p793 = pnand %p782, %p777
      %p794 = pneg %p793
      %p795 = por %p448, %p794
      %s796 = sadd.s32 %s78, 2
    $region22: #{tpu_custom_call.1} parent=1 // loop_footer
      _
    $region23: #{tpu_custom_call.1} parent=1 // loop_footer_branch
      %77 = sbr.rel target = $region19
    $region24: #{tpu_custom_call.1} parent=1 // loop_exit
      _
    %v797 = vld [vmem:[#allocation2] sm:$0xff]
    %v798 = vld [vmem:[#allocation2 + $0x8] sm:$0xff]
    %v799 = vld [vmem:[#allocation2 + $0x10] sm:$0xff]
    %v800 = vld [vmem:[#allocation2 + $0x18] sm:$0xff]
    %v801 = vld [vmem:[#allocation2 + $0x20] sm:$0xff]
    %v802 = vld [vmem:[#allocation2 + $0x28] sm:$0xff]
    %v803 = vld [vmem:[#allocation2 + $0x30] sm:$0xff]
    %v804 = vld [vmem:[#allocation2 + $0x38] sm:$0xff]
    %vm805 = vcmask 130048
    %v807 = vsel %vm805, %v79, 0
    %809 = vmatprep.subr.mxu0 0.0
    %810 = vmatpush1.msra.mxu0 0.0
    %811 = vmatprep.subr.mxu0 0.0
    %812 = vmatpush1.msra.mxu0 0.0
    %813 = vmatprep.subr.mxu0 0.0
    %814 = vmatpush1.msra.mxu0 0.0
    %815 = vmatprep.subr.mxu0 0.0
    %816 = vmatpush1.msra.mxu0 0.0
    %817 = vmatprep.subr.mxu0 0.0
    %818 = vmatpush1.msra.mxu0 0.0
    %819 = vmatprep.subr.mxu0 0.0
    %820 = vmatpush1.msra.mxu0 0.0
    %821 = vmatprep.subr.mxu0 0.0
    %822 = vmatpush1.msra.mxu0 0.0
    %823 = vmatprep.subr.mxu0 0.0
    %824 = vmatpush1.msra.mxu0 0.0
    %825 = vmatprep.subr.mxu0 0.0
    %826 = vmatpush1.msra.mxu0 0.0
    %827 = vmatprep.subr.mxu0 0.0
    %828 = vmatpush1.msra.mxu0 0.0
    %829 = vmatprep.subr.mxu0 0.0
    %830 = vmatpush1.msra.mxu0 0.0
    %831 = vmatprep.subr.mxu0 0.0
    %832 = vmatpush1.msra.mxu0 0.0
    %833 = vmatprep.subr.mxu0 0.0
    %834 = vmatpush1.msra.mxu0 0.0
    %835 = vmatprep.subr.mxu0 0.0
    %836 = vmatpush1.msra.mxu0 0.0
    %837 = vmatprep.subr.mxu0 0.0
    %838 = vmatpush1.msra.mxu0 %v798
    %839 = vmatprep.subr.mxu0 0.0
    %840 = vmatpush1.msra.mxu0 %v797
    %841 = vmatprep.subr.mxu0 0.0
    %842 = vmatpush2.msra.mxu0 0.0
    %843 = vmatprep.subr.mxu0 0.0
    %844 = vmatpush2.msra.mxu0 0.0
    %845 = vmatprep.subr.mxu0 0.0
    %846 = vmatpush2.msra.mxu0 0.0
    %847 = vmatprep.subr.mxu0 0.0
    %848 = vmatpush2.msra.mxu0 0.0
    %849 = vmatprep.subr.mxu0 0.0
    %850 = vmatpush2.msra.mxu0 0.0
    %851 = vmatprep.subr.mxu0 0.0
    %852 = vmatpush2.msra.mxu0 0.0
    %853 = vmatprep.subr.mxu0 0.0
    %854 = vmatpush2.msra.mxu0 0.0
    %855 = vmatprep.subr.mxu0 0.0
    %856 = vmatpush2.msra.mxu0 0.0
    %857 = vmatprep.subr.mxu0 0.0
    %858 = vmatpush2.msra.mxu0 0.0
    %859 = vmatprep.subr.mxu0 0.0
    %860 = vmatpush2.msra.mxu0 0.0
    %861 = vmatprep.subr.mxu0 0.0
    %862 = vmatpush2.msra.mxu0 0.0
    %863 = vmatprep.subr.mxu0 0.0
    %864 = vmatpush2.msra.mxu0 0.0
    %865 = vmatprep.subr.mxu0 0.0
    %866 = vmatpush2.msra.mxu0 0.0
    %867 = vmatprep.subr.mxu0 0.0
    %868 = vmatpush2.msra.mxu0 0.0
    %869 = vmatprep.subr.mxu0 0.0
    %870 = vmatpush2.msra.mxu0 0.0
    %871 = vmatprep.subr.mxu0 0.0
    %872 = vmatpush2.msra.mxu0 0.0
    %873 = vmatprep.mubr.f32.mxu0 0.0
    %874 = vmatmul.mubr.f32.gmra.mxu0 %v807
    %v875 = vpop.f32.mrf.mxu0
    %v876 = vadd.f32 0.0, %v875
    %v877 = vpop.f32.mrf.mxu0
    %878 = vdwg.mxu0
    %v880 = vsel %vm805, %v80, 0
    %882 = vmatprep.subr.mxu0 0.0
    %883 = vmatpush1.msra.mxu0 0.0
    %884 = vmatprep.subr.mxu0 0.0
    %885 = vmatpush1.msra.mxu0 0.0
    %886 = vmatprep.subr.mxu0 0.0
    %887 = vmatpush1.msra.mxu0 0.0
    %888 = vmatprep.subr.mxu0 0.0
    %889 = vmatpush1.msra.mxu0 0.0
    %890 = vmatprep.subr.mxu0 0.0
    %891 = vmatpush1.msra.mxu0 0.0
    %892 = vmatprep.subr.mxu0 0.0
    %893 = vmatpush1.msra.mxu0 0.0
    %894 = vmatprep.subr.mxu0 0.0
    %895 = vmatpush1.msra.mxu0 0.0
    %896 = vmatprep.subr.mxu0 0.0
    %897 = vmatpush1.msra.mxu0 0.0
    %898 = vmatprep.subr.mxu0 0.0
    %899 = vmatpush1.msra.mxu0 0.0
    %900 = vmatprep.subr.mxu0 0.0
    %901 = vmatpush1.msra.mxu0 0.0
    %902 = vmatprep.subr.mxu0 0.0
    %903 = vmatpush1.msra.mxu0 0.0
    %904 = vmatprep.subr.mxu0 0.0
    %905 = vmatpush1.msra.mxu0 0.0
    %906 = vmatprep.subr.mxu0 0.0
    %907 = vmatpush1.msra.mxu0 0.0
    %908 = vmatprep.subr.mxu0 0.0
    %909 = vmatpush1.msra.mxu0 0.0
    %910 = vmatprep.subr.mxu0 0.0
    %911 = vmatpush1.msra.mxu0 %v800
    %912 = vmatprep.subr.mxu0 0.0
    %913 = vmatpush1.msra.mxu0 %v799
    %914 = vmatprep.subr.mxu0 0.0
    %915 = vmatpush2.msra.mxu0 0.0
    %916 = vmatprep.subr.mxu0 0.0
    %917 = vmatpush2.msra.mxu0 0.0
    %918 = vmatprep.subr.mxu0 0.0
    %919 = vmatpush2.msra.mxu0 0.0
    %920 = vmatprep.subr.mxu0 0.0
    %921 = vmatpush2.msra.mxu0 0.0
    %922 = vmatprep.subr.mxu0 0.0
    %923 = vmatpush2.msra.mxu0 0.0
    %924 = vmatprep.subr.mxu0 0.0
    %925 = vmatpush2.msra.mxu0 0.0
    %926 = vmatprep.subr.mxu0 0.0
    %927 = vmatpush2.msra.mxu0 0.0
    %928 = vmatprep.subr.mxu0 0.0
    %929 = vmatpush2.msra.mxu0 0.0
    %930 = vmatprep.subr.mxu0 0.0
    %931 = vmatpush2.msra.mxu0 0.0
    %932 = vmatprep.subr.mxu0 0.0
    %933 = vmatpush2.msra.mxu0 0.0
    %934 = vmatprep.subr.mxu0 0.0
    %935 = vmatpush2.msra.mxu0 0.0
    %936 = vmatprep.subr.mxu0 0.0
    %937 = vmatpush2.msra.mxu0 0.0
    %938 = vmatprep.subr.mxu0 0.0
    %939 = vmatpush2.msra.mxu0 0.0
    %940 = vmatprep.subr.mxu0 0.0
    %941 = vmatpush2.msra.mxu0 0.0
    %942 = vmatprep.subr.mxu0 0.0
    %943 = vmatpush2.msra.mxu0 0.0
    %944 = vmatprep.subr.mxu0 0.0
    %945 = vmatpush2.msra.mxu0 0.0
    %946 = vmatprep.mubr.f32.mxu0 0.0
    %947 = vmatmul.mubr.f32.gmra.mxu0 %v880
    %v948 = vpop.f32.mrf.mxu0
    %v949 = vadd.f32 0.0, %v948
    %v950 = vpop.f32.mrf.mxu0
    %951 = vdwg.mxu0
    %v953 = vsel %vm805, %v81, 0
    %955 = vmatprep.subr.mxu0 0.0
    %956 = vmatpush1.msra.mxu0 0.0
    %957 = vmatprep.subr.mxu0 0.0
    %958 = vmatpush1.msra.mxu0 0.0
    %959 = vmatprep.subr.mxu0 0.0
    %960 = vmatpush1.msra.mxu0 0.0
    %961 = vmatprep.subr.mxu0 0.0
    %962 = vmatpush1.msra.mxu0 0.0
    %963 = vmatprep.subr.mxu0 0.0
    %964 = vmatpush1.msra.mxu0 0.0
    %965 = vmatprep.subr.mxu0 0.0
    %966 = vmatpush1.msra.mxu0 0.0
    %967 = vmatprep.subr.mxu0 0.0
    %968 = vmatpush1.msra.mxu0 0.0
    %969 = vmatprep.subr.mxu0 0.0
    %970 = vmatpush1.msra.mxu0 0.0
    %971 = vmatprep.subr.mxu0 0.0
    %972 = vmatpush1.msra.mxu0 0.0
    %973 = vmatprep.subr.mxu0 0.0
    %974 = vmatpush1.msra.mxu0 0.0
    %975 = vmatprep.subr.mxu0 0.0
    %976 = vmatpush1.msra.mxu0 0.0
    %977 = vmatprep.subr.mxu0 0.0
    %978 = vmatpush1.msra.mxu0 0.0
    %979 = vmatprep.subr.mxu0 0.0
    %980 = vmatpush1.msra.mxu0 0.0
    %981 = vmatprep.subr.mxu0 0.0
    %982 = vmatpush1.msra.mxu0 0.0
    %983 = vmatprep.subr.mxu0 0.0
    %984 = vmatpush1.msra.mxu0 %v802
    %985 = vmatprep.subr.mxu0 0.0
    %986 = vmatpush1.msra.mxu0 %v801
    %987 = vmatprep.subr.mxu0 0.0
    %988 = vmatpush2.msra.mxu0 0.0
    %989 = vmatprep.subr.mxu0 0.0
    %990 = vmatpush2.msra.mxu0 0.0
    %991 = vmatprep.subr.mxu0 0.0
    %992 = vmatpush2.msra.mxu0 0.0
    %993 = vmatprep.subr.mxu0 0.0
    %994 = vmatpush2.msra.mxu0 0.0
    %995 = vmatprep.subr.mxu0 0.0
    %996 = vmatpush2.msra.mxu0 0.0
    %997 = vmatprep.subr.mxu0 0.0
    %998 = vmatpush2.msra.mxu0 0.0
    %999 = vmatprep.subr.mxu0 0.0
    %1000 = vmatpush2.msra.mxu0 0.0
    %1001 = vmatprep.subr.mxu0 0.0
    %1002 = vmatpush2.msra.mxu0 0.0
    %1003 = vmatprep.subr.mxu0 0.0
    %1004 = vmatpush2.msra.mxu0 0.0
    %1005 = vmatprep.subr.mxu0 0.0
    %1006 = vmatpush2.msra.mxu0 0.0
    %1007 = vmatprep.subr.mxu0 0.0
    %1008 = vmatpush2.msra.mxu0 0.0
    %1009 = vmatprep.subr.mxu0 0.0
    %1010 = vmatpush2.msra.mxu0 0.0
    %1011 = vmatprep.subr.mxu0 0.0
    %1012 = vmatpush2.msra.mxu0 0.0
    %1013 = vmatprep.subr.mxu0 0.0
    %1014 = vmatpush2.msra.mxu0 0.0
    %1015 = vmatprep.subr.mxu0 0.0
    %1016 = vmatpush2.msra.mxu0 0.0
    %1017 = vmatprep.subr.mxu0 0.0
    %1018 = vmatpush2.msra.mxu0 0.0
    %1019 = vmatprep.mubr.f32.mxu0 0.0
    %1020 = vmatmul.mubr.f32.gmra.mxu0 %v953
    %v1021 = vpop.f32.mrf.mxu0
    %v1022 = vadd.f32 0.0, %v1021
    %v1023 = vpop.f32.mrf.mxu0
    %1024 = vdwg.mxu0
    %v1026 = vsel %vm805, %v82, 0
    %1028 = vmatprep.subr.mxu0 0.0
    %1029 = vmatpush1.msra.mxu0 0.0
    %1030 = vmatprep.subr.mxu0 0.0
    %1031 = vmatpush1.msra.mxu0 0.0
    %1032 = vmatprep.subr.mxu0 0.0
    %1033 = vmatpush1.msra.mxu0 0.0
    %1034 = vmatprep.subr.mxu0 0.0
    %1035 = vmatpush1.msra.mxu0 0.0
    %1036 = vmatprep.subr.mxu0 0.0
    %1037 = vmatpush1.msra.mxu0 0.0
    %1038 = vmatprep.subr.mxu0 0.0
    %1039 = vmatpush1.msra.mxu0 0.0
    %1040 = vmatprep.subr.mxu0 0.0
    %1041 = vmatpush1.msra.mxu0 0.0
    %1042 = vmatprep.subr.mxu0 0.0
    %1043 = vmatpush1.msra.mxu0 0.0
    %1044 = vmatprep.subr.mxu0 0.0
    %1045 = vmatpush1.msra.mxu0 0.0
    %1046 = vmatprep.subr.mxu0 0.0
    %1047 = vmatpush1.msra.mxu0 0.0
    %1048 = vmatprep.subr.mxu0 0.0
    %1049 = vmatpush1.msra.mxu0 0.0
    %1050 = vmatprep.subr.mxu0 0.0
    %1051 = vmatpush1.msra.mxu0 0.0
    %1052 = vmatprep.subr.mxu0 0.0
    %1053 = vmatpush1.msra.mxu0 0.0
    %1054 = vmatprep.subr.mxu0 0.0
    %1055 = vmatpush1.msra.mxu0 0.0
    %1056 = vmatprep.subr.mxu0 0.0
    %1057 = vmatpush1.msra.mxu0 %v804
    %1058 = vmatprep.subr.mxu0 0.0
    %1059 = vmatpush1.msra.mxu0 %v803
    %1060 = vmatprep.subr.mxu0 0.0
    %1061 = vmatpush2.msra.mxu0 0.0
    %1062 = vmatprep.subr.mxu0 0.0
    %1063 = vmatpush2.msra.mxu0 0.0
    %1064 = vmatprep.subr.mxu0 0.0
    %1065 = vmatpush2.msra.mxu0 0.0
    %1066 = vmatprep.subr.mxu0 0.0
    %1067 = vmatpush2.msra.mxu0 0.0
    %1068 = vmatprep.subr.mxu0 0.0
    %1069 = vmatpush2.msra.mxu0 0.0
    %1070 = vmatprep.subr.mxu0 0.0
    %1071 = vmatpush2.msra.mxu0 0.0
    %1072 = vmatprep.subr.mxu0 0.0
    %1073 = vmatpush2.msra.mxu0 0.0
    %1074 = vmatprep.subr.mxu0 0.0
    %1075 = vmatpush2.msra.mxu0 0.0
    %1076 = vmatprep.subr.mxu0 0.0
    %1077 = vmatpush2.msra.mxu0 0.0
    %1078 = vmatprep.subr.mxu0 0.0
    %1079 = vmatpush2.msra.mxu0 0.0
    %1080 = vmatprep.subr.mxu0 0.0
    %1081 = vmatpush2.msra.mxu0 0.0
    %1082 = vmatprep.subr.mxu0 0.0
    %1083 = vmatpush2.msra.mxu0 0.0
    %1084 = vmatprep.subr.mxu0 0.0
    %1085 = vmatpush2.msra.mxu0 0.0
    %1086 = vmatprep.subr.mxu0 0.0
    %1087 = vmatpush2.msra.mxu0 0.0
    %1088 = vmatprep.subr.mxu0 0.0
    %1089 = vmatpush2.msra.mxu0 0.0
    %1090 = vmatprep.subr.mxu0 0.0
    %1091 = vmatpush2.msra.mxu0 0.0
    %1092 = vmatprep.mubr.f32.mxu0 0.0
    %1093 = vmatmul.mubr.f32.gmra.mxu0 %v1026
    %v1094 = vpop.f32.mrf.mxu0
    %v1095 = vadd.f32 0.0, %v1094
    %v1096 = vpop.f32.mrf.mxu0
    %1097 = vdwg.mxu0
    %v1098 = vmul.f32 %v876, 0.5
    %v1099 = vmul.f32 %v949, 0.5
    %v1100 = vmul.f32 %v1022, 0.5
    %v1101 = vmul.f32 %v1095, 0.5
    %v1102 = vadd.f32 %v1098, %v40
    %v1103 = vadd.f32 %v1099, %v41
    %v1104 = vadd.f32 %v1100, %v42
    %v1105 = vadd.f32 %v1101, %v43
    %v1106 = vtanh.pop %v1102
    %v1107 = vtanh.pop %v1103
    %v1108 = vtanh.pop %v1104
    %v1109 = vtanh.pop %v1105
    %1110 = vst.msk [vmem:[#allocation7] sm:$0x1] %vm52, %v1106
    %1111 = vst.msk [vmem:[#allocation7 + $0x1] sm:$0x1] %vm52, %v1107
    %1112 = vst.msk [vmem:[#allocation7 + $0x2] sm:$0x1] %vm52, %v1108
    %1113 = vst.msk [vmem:[#allocation7 + $0x3] sm:$0x1] %vm52, %v1109
    // Predicated region
    $region25: #{tpu_custom_call.1} parent=1 // pred_check
      _
    $region26: #{tpu_custom_call.1} parent=1 // pred_check_branch
      %1115 = sbr.rel (0) target = $region28
    $region27: #{tpu_custom_call.1} parent=1 // pred_region
      %s1117 = ssub.s32 64, 64
      %1118 = vsyncadd [#allocation4], %s1117
      %s1119 = sshll.u32 [#allocation7], 4
      %s1120 = int_to_ptr.vmem [resolvable:$true] %s1119
      %1125 = dma.vmem_to_hbm [thread:$0]  %s1120, 64, %s2, [#allocation4], 16, 16, 1
    $region28: #{tpu_custom_call.1} parent=1 // pred_fallthru
      _
    // Predicated region
    $region29: #{tpu_custom_call.1} parent=1 // pred_check
      _
    $region30: #{tpu_custom_call.1} parent=1 // pred_check_branch
      %1127 = sbr.rel (0) target = $region32
    $region31: #{tpu_custom_call.1} parent=1 // pred_region
      %1128 = dma.done [#allocation4], 64
    $region32: #{tpu_custom_call.1} parent=1 // pred_fallthru
      _
    %1129 = vsyncpa [#allocation3], 1
    %1130 = vsyncpa [#allocation6], 1
    %1131 = vsyncpa [#allocation4], 1

</llo_original>
